<compile_context>
chip_gen: v7x
topology: tpu7x:2x2x1
jax: 0.10.0
libtpu: 0.0.40
codegen_flags: <defaults>
</compile_context>

<pallas_src>
import functools

import jax
import jax.numpy as jnp
from jax.experimental import pallas as pl
from jax.experimental.pallas import tpu as pltpu

_LANE = 128
_SUBLANE = 8
_VMEM_DATA_BUDGET = 32 * 1024 * 1024   # double-buffered block data budget (bytes)
_VMEM_LIMIT_BYTES = 48 * 1024 * 1024   # explicit scoped-VMEM request (> 16/32 MiB defaults)


# ----------------------------------------------------------------------------- kernel


def _actor_kernel(s_ref, i_ref, ws_ref, wi_ref, b_ref, o_ref):
    # s_ref : (tm, S)      i_ref : (tm, F)        (compute dtype, e.g. bf16)
    # ws_ref: (S, tn)      wi_ref: (F, tn)        (compute dtype)
    # b_ref : (1, tn) f32  o_ref : (tm, tn) f32
    y = jnp.dot(s_ref[...], ws_ref[...], preferred_element_type=jnp.float32)
    y = y + jnp.dot(i_ref[...], wi_ref[...], preferred_element_type=jnp.float32)
    y = y + b_ref[...]                       # f32 epilogue (v5e VPU has no bf16)
    o_ref[...] = jnp.maximum(y, 0.0).astype(o_ref.dtype)


# ----------------------------------------------------------------------------- helpers


def _cdiv(a, b):
    return -(-a // b)


def _round_up(x, m):
    return ((x + m - 1) // m) * m


def _pad2d(x, rows, cols):
    r, c = x.shape
    if r == rows and c == cols:
        return x
    return jnp.pad(x, ((0, rows - r), (0, cols - c)))


def _prep_activation(x, rows, dtype):
    # Cast / pad only when actually needed: no wrapper-side HBM round trip otherwise.
    if x.dtype != dtype:
        x = x.astype(dtype)
    if x.shape[0] != rows:
        x = jnp.pad(x, ((0, rows - x.shape[0]), (0, 0)))
    return x


def _choose_batch_tiling(B, batch_tile):
    # v7x has 2 TensorCores: keep >= 2 batch tiles once B >= 16 so
    # dimension_semantics=("parallel", ...) really splits work across cores.
    if B >= 2 * _SUBLANE:
        batch_tile = min(batch_tile, _round_up(_cdiv(B, 2), _SUBLANE))
    batch_tile = max(_SUBLANE, _round_up(batch_tile, _SUBLANE))
    grid_m = _cdiv(B, batch_tile)
    tm = _round_up(_cdiv(B, grid_m), _SUBLANE)   # never pads more than a few rows/tile
    b_pad = grid_m * tm
    return tm, grid_m, b_pad


def _vmem_block_bytes(tm, tn, S, F_dim, act_bytes, w_bytes):
    # Double-buffered pipeline blocks: activations + weights + bias in, f32 out.
    return (2 * tm * (S + F_dim) * act_bytes
            + 2 * (S + F_dim) * tn * w_bytes
            + 2 * tn * 4
            + 2 * tm * tn * 4)


# ----------------------------------------------------------------------------- param prep


def prepare_actor_params(weight, bias, state_width, image_width, *,
                         out_tile=2048, compute_dtype=jnp.bfloat16):
    """One-time weight prep (hoisted off the per-step critical path).

    weight : (3*state_width + image_width, emb_size) f32
    bias   : (emb_size,) f32
    Returns (w_state, w_img, bias_row, out_dim, out_block).
    """
    d_in, d_out = weight.shape
    S, Fw = state_width, image_width
    assert d_in == 3 * S + Fw, "weight rows must equal 3*state_width + image_width"

    # Linearity fold of the replicated-state concat.
    w_state = weight[0:S] + weight[S:2 * S] + weight[2 * S:3 * S]   # (S, d_out)
    w_img = weight[3 * S:]                                          # (F, d_out)

    # Lane-dense output tiling (multiple of 128) with an optional N-axis split for
    # large emb_size (bounds VMEM footprint on v7x / v5e scoped default).
    grid_n = max(1, _cdiv(d_out, out_tile))
    tn = _round_up(_cdiv(d_out, grid_n), _LANE)
    n_total = grid_n * tn

    w_state_p = _pad2d(w_state.astype(compute_dtype), S, n_total)
    w_img_p = _pad2d(w_img.astype(compute_dtype), Fw, n_total)
    bias_row = _pad2d(bias.reshape(1, d_out).astype(jnp.float32), 1, n_total)
    return w_state_p, w_img_p, bias_row, d_out, tn


# ----------------------------------------------------------------------------- forward


def actor_forward_folded(image_features, state, w_state, w_img, bias_row, *,
                         out_dim, out_block, batch_tile=512):
    """Forward pass with pre-folded / pre-padded parameters (see prepare_actor_params)."""
    B, S = state.shape
    F_dim = image_features.shape[1]
    n_total = w_state.shape[1]
    assert w_img.shape[1] == n_total and bias_row.shape == (1, n_total)
    assert out_block % _LANE == 0 and n_total % out_block == 0
    tn = out_block
    grid_n = n_total // tn

    compute_dtype = w_state.dtype
    elt_bytes = compute_dtype.itemsize

    # Batch tiling: minimal padding, >= 2 tiles for megacore, VMEM-budget-aware shrink.
    bt = batch_tile
    while True:
        tm, grid_m, b_pad = _choose_batch_tiling(B, bt)
        if tm <= _SUBLANE:
            break
        if _vmem_block_bytes(tm, tn, S, F_dim, elt_bytes, elt_bytes) <= _VMEM_DATA_BUDGET:
            break
        bt = max(_SUBLANE, tm // 2)

    state_p = _prep_activation(state, b_pad, compute_dtype)
    img_p = _prep_activation(image_features, b_pad, compute_dtype)

    flops = 2 * b_pad * (S + F_dim) * n_total
    bytes_accessed = ((state_p.size + img_p.size + w_state.size + w_img.size) * elt_bytes
                      + (bias_row.size + b_pad * n_total) * 4)

    out = pl.pallas_call(
        _actor_kernel,
        out_shape=jax.ShapeDtypeStruct((b_pad, n_total), jnp.float32),
        grid=(grid_m, grid_n),
        in_specs=[
            pl.BlockSpec((tm, S), lambda i, j: (i, 0)),       # state tile (batch-sharded)
            pl.BlockSpec((tm, F_dim), lambda i, j: (i, 0)),   # image tile (batch-sharded)
            pl.BlockSpec((S, tn), lambda i, j: (0, j)),       # folded state weight
            pl.BlockSpec((F_dim, tn), lambda i, j: (0, j)),   # image weight
            pl.BlockSpec((1, tn), lambda i, j: (0, j)),       # bias (f32)
        ],
        out_specs=pl.BlockSpec((tm, tn), lambda i, j: (i, j)),
        compiler_params=pltpu.CompilerParams(
            dimension_semantics=("parallel", "parallel"),
            vmem_limit_bytes=_VMEM_LIMIT_BYTES),
        cost_estimate=pl.CostEstimate(
            flops=int(flops), transcendentals=0, bytes_accessed=int(bytes_accessed)),
    )(state_p, img_p, w_state, w_img, bias_row)

    # Skip the output HBM round trip entirely when no padding was applied.
    if b_pad == B and n_total == out_dim:
        return out
    return out[:B, :out_dim]


def actor_forward(image_features, state, weight, bias, *, batch_tile=512,
                  out_tile=2048, compute_dtype=jnp.bfloat16):
    """Convenience one-shot path (param prep + forward). Prefer prepare_actor_params +
    actor_forward_folded when calling the forward repeatedly."""
    S = state.shape[1]
    F_dim = image_features.shape[1]
    w_state, w_img, bias_row, d_out, out_block = prepare_actor_params(
        weight, bias, S, F_dim, out_tile=out_tile, compute_dtype=compute_dtype)
    return actor_forward_folded(image_features, state, w_state, w_img, bias_row,
                                out_dim=d_out, out_block=out_block,
                                batch_tile=batch_tile)


def init_actor_params(key, state_dim, emb_size):
    """Deterministic init mimicking PyTorch nn.Linear default (U(-k, k), k=1/sqrt(fan_in))."""
    k_w, k_b = jax.random.split(key)
    bound = 1.0 / jnp.sqrt(jnp.float32(state_dim))
    weight = jax.random.uniform(
        k_w, (state_dim, emb_size), dtype=jnp.float32, minval=-bound, maxval=bound)
    bias = jax.random.uniform(
        k_b, (emb_size,), dtype=jnp.float32, minval=-bound, maxval=bound)
    return weight, bias


if __name__ == "__main__":
    # Small shapes consistent with the forward pass:
    #   state: (B, S); image_features: (B, F); state_dim = 3*S + F
    B, S, F_dim = 2, 8, 8
    state_dim = 3 * S + F_dim          # 32
    emb_size = 32
    action_dim, action_std = 4, 0.1    # unused in forward (kept for signature parity)

    key = jax.random.PRNGKey(0)
    k_img, k_state, k_params = jax.random.split(key, 3)

    image_features = jax.random.normal(k_img, (B, F_dim), dtype=jnp.float32)
    state = jax.random.normal(k_state, (B, S), dtype=jnp.float32)
    weight, bias = init_actor_params(k_params, state_dim, emb_size)

    # Reference (plain JAX, original concat formulation).
    dense_input = jnp.concatenate((state, state, state, image_features), axis=-1)
    ref = jnp.maximum(dense_input @ weight + bias, 0.0)

    # f32 compute path: tight tolerance check.
    out_f32 = jax.block_until_ready(
        actor_forward(image_features, state, weight, bias, compute_dtype=jnp.float32))
    assert out_f32.shape == (B, emb_size)
    assert jnp.allclose(out_f32, ref, atol=1e-5, rtol=1e-5)

    # bf16 compute path (default): one-time weight prep + jitted forward.
    w_state_p, w_img_p, bias_row, d_out, out_block = prepare_actor_params(
        weight, bias, S, F_dim, compute_dtype=jnp.bfloat16)
    fwd = jax.jit(functools.partial(actor_forward_folded,
                                    out_dim=d_out, out_block=out_block))
    out_bf16 = jax.block_until_ready(
        fwd(image_features, state, w_state_p, w_img_p, bias_row))
    assert out_bf16.shape == (B, emb_size)
    assert jnp.allclose(out_bf16, ref, atol=5e-2, rtol=5e-2)

    print("KERNEL_OK")
</pallas_src>

<mosaic_0001>
module attributes {stable_mosaic.version = 11 : i64} {
  func.func @_actor_kernel(%arg0: i32, %arg1: i32, %arg2: memref<8x8xf32, #tpu.memory_space<vmem>>, %arg3: memref<8x8xf32, #tpu.memory_space<vmem>>, %arg4: memref<8x128xf32, #tpu.memory_space<vmem>>, %arg5: memref<8x128xf32, #tpu.memory_space<vmem>>, %arg6: memref<1x128xf32, #tpu.memory_space<vmem>>, %arg7: memref<8x128xf32, #tpu.memory_space<vmem>>) attributes {dimension_semantics = [#tpu.dimension_semantics<parallel>, #tpu.dimension_semantics<parallel>], iteration_bounds = array<i64: 1, 1>, scalar_prefetch = 0 : i64, scratch_operands = 0 : i64, tpu.core_type = #tpu.core_type<tc>, window_params = [{transform_indices = @transform_0, window_bounds = array<i64: 8, 8>}, {transform_indices = @transform_1, window_bounds = array<i64: 8, 8>}, {transform_indices = @transform_2, window_bounds = array<i64: 8, 128>}, {transform_indices = @transform_3, window_bounds = array<i64: 8, 128>}, {transform_indices = @transform_4, window_bounds = array<i64: 1, 128>}, {transform_indices = @transform_5, window_bounds = array<i64: 8, 128>}]} {
    %c0 = arith.constant 0 : index
    %c0_0 = arith.constant 0 : index
    %0 = vector.load %arg2[%c0, %c0_0] : memref<8x8xf32, #tpu.memory_space<vmem>>, vector<8x8xf32>
    %c0_1 = arith.constant 0 : index
    %c0_2 = arith.constant 0 : index
    %1 = vector.load %arg4[%c0_1, %c0_2] : memref<8x128xf32, #tpu.memory_space<vmem>>, vector<8x128xf32>
    %cst = arith.constant dense<0.000000e+00> : vector<8x128xf32>
    %2 = tpu.matmul %0, %1, %cst {dimension_numbers = #tpu.dot_dimension_numbers<[1], [0], [0], [1], [0, 0, 1, 1], [], []>} : vector<8x8xf32>, vector<8x128xf32>, vector<8x128xf32> -> vector<8x128xf32>
    %c0_3 = arith.constant 0 : index
    %c0_4 = arith.constant 0 : index
    %3 = vector.load %arg3[%c0_3, %c0_4] : memref<8x8xf32, #tpu.memory_space<vmem>>, vector<8x8xf32>
    %c0_5 = arith.constant 0 : index
    %c0_6 = arith.constant 0 : index
    %4 = vector.load %arg5[%c0_5, %c0_6] : memref<8x128xf32, #tpu.memory_space<vmem>>, vector<8x128xf32>
    %cst_7 = arith.constant dense<0.000000e+00> : vector<8x128xf32>
    %5 = tpu.matmul %3, %4, %cst_7 {dimension_numbers = #tpu.dot_dimension_numbers<[1], [0], [0], [1], [0, 0, 1, 1], [], []>} : vector<8x8xf32>, vector<8x128xf32>, vector<8x128xf32> -> vector<8x128xf32>
    %6 = arith.addf %2, %5 : vector<8x128xf32>
    %c0_8 = arith.constant 0 : index
    %c0_9 = arith.constant 0 : index
    %7 = vector.load %arg6[%c0_8, %c0_9] : memref<1x128xf32, #tpu.memory_space<vmem>>, vector<1x128xf32>
    %8 = vector.broadcast %7 : vector<1x128xf32> to vector<8x128xf32>
    %9 = arith.addf %6, %8 : vector<8x128xf32>
    %cst_10 = arith.constant 0.000000e+00 : f32
    %10 = vector.broadcast %cst_10 : f32 to vector<8x128xf32>
    %11 = arith.maximumf %9, %10 : vector<8x128xf32>
    %c0_11 = arith.constant 0 : index
    %c0_12 = arith.constant 0 : index
    %12 = vector.load %arg7[%c0_11, %c0_12] : memref<8x128xf32, #tpu.memory_space<vmem>>, vector<8x128xf32>
    tpu.vector_store %arg7[%c0_11, %c0_12], %11 {strides = array<i32>} : memref<8x128xf32, #tpu.memory_space<vmem>>, vector<8x128xf32>,
    return
  }
  func.func @transform_0(%arg0: i32, %arg1: i32) -> (i32, i32) {
    %c0_i32 = arith.constant 0 : i32
    %c0_i32_0 = arith.constant 0 : i32
    return %arg0, %c0_i32 : i32, i32
  }
  func.func @transform_1(%arg0: i32, %arg1: i32) -> (i32, i32) {
    %c0_i32 = arith.constant 0 : i32
    %c0_i32_0 = arith.constant 0 : i32
    return %arg0, %c0_i32 : i32, i32
  }
  func.func @transform_2(%arg0: i32, %arg1: i32) -> (i32, i32) {
    %c0_i32 = arith.constant 0 : i32
    %c0_i32_0 = arith.constant 0 : i32
    return %c0_i32, %arg1 : i32, i32
  }
  func.func @transform_3(%arg0: i32, %arg1: i32) -> (i32, i32) {
    %c0_i32 = arith.constant 0 : i32
    %c0_i32_0 = arith.constant 0 : i32
    return %c0_i32, %arg1 : i32, i32
  }
  func.func @transform_4(%arg0: i32, %arg1: i32) -> (i32, i32) {
    %c0_i32 = arith.constant 0 : i32
    %c0_i32_0 = arith.constant 0 : i32
    return %c0_i32, %arg1 : i32, i32
  }
  func.func @transform_5(%arg0: i32, %arg1: i32) -> (i32, i32) {
    %c0_i32 = arith.constant 0 : i32
    return %arg0, %arg1 : i32, i32
  }
}

</mosaic_0001>

<llo_original>
// kernel: tpu_custom_call.1
$region0: #{tpu_custom_call.1}
  #allocation0 [shape = 'u32[]', space=smem, size = 0x4, offset = 0x4, fixed_abs, tag = 'smem constant byte address 0x4 - core index']
  #allocation1 [shape = 'u32[144,128]{1,0:T(1,128)}', space=vmem, size = 0x12000, scoped, tag = 'internal scratch']
  %s0 = inlined_call_operand.hbm [shape: f32[8,8], index: 0, kind: input, shape index: {}]
  %s1 = inlined_call_operand.hbm [shape: f32[8,8], index: 1, kind: input, shape index: {}]
  %s2 = inlined_call_operand.hbm [shape: f32[8,128], index: 2, kind: input, shape index: {}]
  %s3 = inlined_call_operand.vmem [shape: f32[8,128], index: 3, kind: input, shape index: {}]
  %s4 = inlined_call_operand.vmem [shape: f32[1,128], index: 4, kind: input, shape index: {}]
  %s5 = inlined_call_operand.hbm [shape: f32[8,128], index: 5, kind: output, shape index: {}]
  %s6 = sld [smem:[#allocation0]]
  $region42: #{tpu_custom_call.1} parent=0
    _
  %s8 = ssub.s32 1, %s6
  %s9 = scalar_select 0, %s8, %s6
  $region1: #{tpu_custom_call.1} parent=0
    #allocation2 [shape = 'u8[4096]{0}', space=vmem, size = 0x1000, scoped, tag = 'input window, operand 0, single buffered']
    #allocation3 [shape = 's32[1]{0}', space=sflag, size = 0x4, scoped, tag = 'scoped memory for tpu_custom_call.1']
    #allocation4 [shape = 's32[1]{0}', space=sflag, size = 0x4, scoped, tag = 'scoped memory for tpu_custom_call.1']
    #allocation5 [shape = 'u8[4096]{0}', space=vmem, size = 0x1000, scoped, tag = 'input window, operand 1, single buffered']
    #allocation6 [shape = 's32[1]{0}', space=sflag, size = 0x4, scoped, tag = 'scoped memory for tpu_custom_call.1']
    #allocation7 [shape = 'u8[4096]{0}', space=vmem, size = 0x1000, scoped, tag = 'input window, operand 2, single buffered']
    #allocation8 [shape = 'u8[4096]{0}', space=vmem, size = 0x1000, scoped, tag = 'output window, operand 0, single buffered']
    %10 = vsyncpa [#allocation3], 0
    %11 = vsyncpa [#allocation6], 0
    %12 = vsyncpa [#allocation4], 0
    // Predicated region
    $region2: #{tpu_custom_call.1} parent=1 // pred_check
      _
    $region3: #{tpu_custom_call.1} parent=1 // pred_check_branch
      %14 = sbr.rel (0) target = $region5
    $region4: #{tpu_custom_call.1} parent=1 // pred_region
      %s16 = ssub.s32 128, 128
      %17 = vsyncadd [#allocation3], %s16
      %s19 = sshll.u32 [#allocation2], 4
      %s20 = int_to_ptr.vmem [resolvable:$true] %s19
      %22 = dma.hbm_to_vmem [thread:$0]  %s0, 128, %s20, [#allocation3]
    $region5: #{tpu_custom_call.1} parent=1 // pred_fallthru
      _
    // Predicated region
    $region6: #{tpu_custom_call.1} parent=1 // pred_check
      _
    $region7: #{tpu_custom_call.1} parent=1 // pred_check_branch
      %24 = sbr.rel (0) target = $region9
    $region8: #{tpu_custom_call.1} parent=1 // pred_region
      %s26 = ssub.s32 128, 128
      %27 = vsyncadd [#allocation6], %s26
      %s29 = sshll.u32 [#allocation5], 4
      %s30 = int_to_ptr.vmem [resolvable:$true] %s29
      %32 = dma.hbm_to_vmem [thread:$0]  %s1, 128, %s30, [#allocation6]
    $region9: #{tpu_custom_call.1} parent=1 // pred_fallthru
      _
    // Predicated region
    $region10: #{tpu_custom_call.1} parent=1 // pred_check
      _
    $region11: #{tpu_custom_call.1} parent=1 // pred_check_branch
      %34 = sbr.rel (0) target = $region13
    $region12: #{tpu_custom_call.1} parent=1 // pred_region
      %s36 = ssub.s32 128, 128
      %37 = vsyncadd [#allocation6], %s36
      %s39 = sshll.u32 [#allocation7], 4
      %s40 = int_to_ptr.vmem [resolvable:$true] %s39
      %42 = dma.hbm_to_vmem [thread:$0]  %s2, 128, %s40, [#allocation6]
    $region13: #{tpu_custom_call.1} parent=1 // pred_fallthru
      _
    // Predicated region
    $region14: #{tpu_custom_call.1} parent=1 // pred_check
      _
    $region15: #{tpu_custom_call.1} parent=1 // pred_check_branch
      %44 = sbr.rel (0) target = $region17
    $region16: #{tpu_custom_call.1} parent=1 // pred_region
      _
    $region17: #{tpu_custom_call.1} parent=1 // pred_fallthru
      _
    // Predicated region
    $region18: #{tpu_custom_call.1} parent=1 // pred_check
      _
    $region19: #{tpu_custom_call.1} parent=1 // pred_check_branch
      %46 = sbr.rel (0) target = $region21
    $region20: #{tpu_custom_call.1} parent=1 // pred_region
      _
    $region21: #{tpu_custom_call.1} parent=1 // pred_fallthru
      _
    // Predicated region
    $region22: #{tpu_custom_call.1} parent=1 // pred_check
      _
    $region23: #{tpu_custom_call.1} parent=1 // pred_check_branch
      %48 = sbr.rel (0) target = $region25
    $region24: #{tpu_custom_call.1} parent=1 // pred_region
      %49 = dma.done [#allocation3], 128
    $region25: #{tpu_custom_call.1} parent=1 // pred_fallthru
      _
    // Predicated region
    $region26: #{tpu_custom_call.1} parent=1 // pred_check
      _
    $region27: #{tpu_custom_call.1} parent=1 // pred_check_branch
      %51 = sbr.rel (0) target = $region29
    $region28: #{tpu_custom_call.1} parent=1 // pred_region
      %52 = dma.done [#allocation6], 128
    $region29: #{tpu_custom_call.1} parent=1 // pred_fallthru
      _
    // Predicated region
    $region30: #{tpu_custom_call.1} parent=1 // pred_check
      _
    $region31: #{tpu_custom_call.1} parent=1 // pred_check_branch
      %54 = sbr.rel (0) target = $region33
    $region32: #{tpu_custom_call.1} parent=1 // pred_region
      %55 = dma.done [#allocation6], 128
    $region33: #{tpu_custom_call.1} parent=1 // pred_fallthru
      _
    %v56 = vld [vmem:[#allocation2] sm:$0xff]
    %v57 = vld [vmem:[#allocation7] sm:$0xff]
    %v58 = vld [vmem:[#allocation5] sm:$0xff]
    %v59 = vld [vmem:[%s3] sm:$0xff]
    %vm60 = vcmask 64512
    %v62 = vsel %vm60, %v58, 0
    %64 = vmatprep.subr.mxu0 0.0
    %65 = vmatpush1.msra.mxu0 %v59
    %66 = vmatprep.subr.mxu0 0.0
    %67 = vmatpush1.msra.mxu0 0.0
    %68 = vmatprep.subr.mxu0 0.0
    %69 = vmatpush1.msra.mxu0 0.0
    %70 = vmatprep.subr.mxu0 0.0
    %71 = vmatpush1.msra.mxu0 0.0
    %72 = vmatprep.subr.mxu0 0.0
    %73 = vmatpush1.msra.mxu0 0.0
    %74 = vmatprep.subr.mxu0 0.0
    %75 = vmatpush1.msra.mxu0 0.0
    %76 = vmatprep.subr.mxu0 0.0
    %77 = vmatpush1.msra.mxu0 0.0
    %78 = vmatprep.subr.mxu0 0.0
    %79 = vmatpush1.msra.mxu0 0.0
    %80 = vmatprep.subr.mxu0 0.0
    %81 = vmatpush1.msra.mxu0 0.0
    %82 = vmatprep.subr.mxu0 0.0
    %83 = vmatpush1.msra.mxu0 0.0
    %84 = vmatprep.subr.mxu0 0.0
    %85 = vmatpush1.msra.mxu0 0.0
    %86 = vmatprep.subr.mxu0 0.0
    %87 = vmatpush1.msra.mxu0 0.0
    %88 = vmatprep.subr.mxu0 0.0
    %89 = vmatpush1.msra.mxu0 0.0
    %90 = vmatprep.subr.mxu0 0.0
    %91 = vmatpush1.msra.mxu0 0.0
    %92 = vmatprep.subr.mxu0 0.0
    %93 = vmatpush1.msra.mxu0 0.0
    %94 = vmatprep.subr.mxu0 0.0
    %95 = vmatpush1.msra.mxu0 0.0
    %96 = vmatprep.subr.mxu0 0.0
    %97 = vmatpush1.msra.mxu0 0.0
    %98 = vmatprep.subr.mxu0 0.0
    %99 = vmatpush1.msra.mxu0 0.0
    %100 = vmatprep.subr.mxu0 0.0
    %101 = vmatpush1.msra.mxu0 0.0
    %102 = vmatprep.subr.mxu0 0.0
    %103 = vmatpush1.msra.mxu0 0.0
    %104 = vmatprep.subr.mxu0 0.0
    %105 = vmatpush1.msra.mxu0 0.0
    %106 = vmatprep.subr.mxu0 0.0
    %107 = vmatpush1.msra.mxu0 0.0
    %108 = vmatprep.subr.mxu0 0.0
    %109 = vmatpush1.msra.mxu0 0.0
    %110 = vmatprep.subr.mxu0 0.0
    %111 = vmatpush1.msra.mxu0 0.0
    %112 = vmatprep.subr.mxu0 0.0
    %113 = vmatpush1.msra.mxu0 0.0
    %114 = vmatprep.subr.mxu0 0.0
    %115 = vmatpush1.msra.mxu0 0.0
    %116 = vmatprep.subr.mxu0 0.0
    %117 = vmatpush1.msra.mxu0 0.0
    %118 = vmatprep.subr.mxu0 0.0
    %119 = vmatpush1.msra.mxu0 0.0
    %120 = vmatprep.subr.mxu0 0.0
    %121 = vmatpush1.msra.mxu0 0.0
    %122 = vmatprep.subr.mxu0 0.0
    %123 = vmatpush1.msra.mxu0 0.0
    %124 = vmatprep.subr.mxu0 0.0
    %125 = vmatpush1.msra.mxu0 0.0
    %126 = vmatprep.subr.mxu0 0.0
    %127 = vmatpush1.msra.mxu0 0.0
    %128 = vmatprep.mubr.f32.mxu0 0.0
    %129 = vmatmul.mubr.f32.gmra.mrb[0].mxu0 %v62
    %v130 = vpop.f32.mrb[0].mxu0
    %v131 = vadd.f32 0.0, %v130
    %v132 = vpop.f32.mrb[0].mxu0
    %133 = vdwg.mxu0
    %v135 = vsel %vm60, %v56, 0
    %137 = vmatprep.subr.mxu0 0.0
    %138 = vmatpush1.msra.mxu0 %v57
    %139 = vmatprep.subr.mxu0 0.0
    %140 = vmatpush1.msra.mxu0 0.0
    %141 = vmatprep.subr.mxu0 0.0
    %142 = vmatpush1.msra.mxu0 0.0
    %143 = vmatprep.subr.mxu0 0.0
    %144 = vmatpush1.msra.mxu0 0.0
    %145 = vmatprep.subr.mxu0 0.0
    %146 = vmatpush1.msra.mxu0 0.0
    %147 = vmatprep.subr.mxu0 0.0
    %148 = vmatpush1.msra.mxu0 0.0
    %149 = vmatprep.subr.mxu0 0.0
    %150 = vmatpush1.msra.mxu0 0.0
    %151 = vmatprep.subr.mxu0 0.0
    %152 = vmatpush1.msra.mxu0 0.0
    %153 = vmatprep.subr.mxu0 0.0
    %154 = vmatpush1.msra.mxu0 0.0
    %155 = vmatprep.subr.mxu0 0.0
    %156 = vmatpush1.msra.mxu0 0.0
    %157 = vmatprep.subr.mxu0 0.0
    %158 = vmatpush1.msra.mxu0 0.0
    %159 = vmatprep.subr.mxu0 0.0
    %160 = vmatpush1.msra.mxu0 0.0
    %161 = vmatprep.subr.mxu0 0.0
    %162 = vmatpush1.msra.mxu0 0.0
    %163 = vmatprep.subr.mxu0 0.0
    %164 = vmatpush1.msra.mxu0 0.0
    %165 = vmatprep.subr.mxu0 0.0
    %166 = vmatpush1.msra.mxu0 0.0
    %167 = vmatprep.subr.mxu0 0.0
    %168 = vmatpush1.msra.mxu0 0.0
    %169 = vmatprep.subr.mxu0 0.0
    %170 = vmatpush1.msra.mxu0 0.0
    %171 = vmatprep.subr.mxu0 0.0
    %172 = vmatpush1.msra.mxu0 0.0
    %173 = vmatprep.subr.mxu0 0.0
    %174 = vmatpush1.msra.mxu0 0.0
    %175 = vmatprep.subr.mxu0 0.0
    %176 = vmatpush1.msra.mxu0 0.0
    %177 = vmatprep.subr.mxu0 0.0
    %178 = vmatpush1.msra.mxu0 0.0
    %179 = vmatprep.subr.mxu0 0.0
    %180 = vmatpush1.msra.mxu0 0.0
    %181 = vmatprep.subr.mxu0 0.0
    %182 = vmatpush1.msra.mxu0 0.0
    %183 = vmatprep.subr.mxu0 0.0
    %184 = vmatpush1.msra.mxu0 0.0
    %185 = vmatprep.subr.mxu0 0.0
    %186 = vmatpush1.msra.mxu0 0.0
    %187 = vmatprep.subr.mxu0 0.0
    %188 = vmatpush1.msra.mxu0 0.0
    %189 = vmatprep.subr.mxu0 0.0
    %190 = vmatpush1.msra.mxu0 0.0
    %191 = vmatprep.subr.mxu0 0.0
    %192 = vmatpush1.msra.mxu0 0.0
    %193 = vmatprep.subr.mxu0 0.0
    %194 = vmatpush1.msra.mxu0 0.0
    %195 = vmatprep.subr.mxu0 0.0
    %196 = vmatpush1.msra.mxu0 0.0
    %197 = vmatprep.subr.mxu0 0.0
    %198 = vmatpush1.msra.mxu0 0.0
    %199 = vmatprep.subr.mxu0 0.0
    %200 = vmatpush1.msra.mxu0 0.0
    %201 = vmatprep.mubr.f32.mxu0 0.0
    %202 = vmatmul.mubr.f32.gmra.mrb[0].mxu0 %v135
    %v203 = vpop.f32.mrb[0].mxu0
    %v204 = vadd.f32 %v131, %v203
    %v205 = vpop.f32.mrb[0].mxu0
    %206 = vdwg.mxu0
    %v207 = vld [vmem:[%s4] sm:$0x1]
    %v209 = vlaneseq
    %v210 = vshrl.u32 %v209, 7
    %v211 = vsub.s32 0, %v210
    %v212 = vrot.slane %v207, %v211
    %v214 = vadd.f32 %v204, %v212
    %v215 = vmax.f32 %v214, 0.0
    %216 = vst [vmem:[#allocation8] sm:$0xff] %v215
    // Predicated region
    $region34: #{tpu_custom_call.1} parent=1 // pred_check
      _
    $region35: #{tpu_custom_call.1} parent=1 // pred_check_branch
      %218 = sbr.rel (0) target = $region37
    $region36: #{tpu_custom_call.1} parent=1 // pred_region
      %s220 = ssub.s32 128, 128
      %221 = vsyncadd [#allocation4], %s220
      %s223 = sshll.u32 [#allocation8], 4
      %s224 = int_to_ptr.vmem [resolvable:$true] %s223
      %226 = dma.vmem_to_hbm [thread:$0]  %s224, 128, %s5, [#allocation4]
    $region37: #{tpu_custom_call.1} parent=1 // pred_fallthru
      _
    // Predicated region
    $region38: #{tpu_custom_call.1} parent=1 // pred_check
      _
    $region39: #{tpu_custom_call.1} parent=1 // pred_check_branch
      %228 = sbr.rel (0) target = $region41
    $region40: #{tpu_custom_call.1} parent=1 // pred_region
      %229 = dma.done [#allocation4], 128
    $region41: #{tpu_custom_call.1} parent=1 // pred_fallthru
      _
    %230 = vsyncpa [#allocation3], 1
    %231 = vsyncpa [#allocation6], 1
    %232 = vsyncpa [#allocation4], 1

</llo_original>
